<compile_context>
chip_gen: v5e
topology: v5e:2x2
jax: 0.10.0
libtpu: 0.0.40
codegen_flags: <defaults>
</compile_context>

<pallas_src>
import numpy as np
import jax
import jax.numpy as jnp
from jax.experimental import pallas as pl
from jax.experimental.pallas import tpu as pltpu


def _roll_lanes(a, s):
    """Circular shift along the lane (last) axis: out[..., i] = a[..., (i + s) % W]."""
    w = a.shape[-1]
    s = s % w
    if s == 0:
        return a
    return jnp.concatenate([a[..., s:], a[..., :s]], axis=-1)


def projection_block_kernel(xeo_ref, mask_ref,
                            w1_ref, b1_ref,
                            w2_ref, b2_ref,
                            wep_ref, bep_ref,
                            out_ref):
    # conv1 (k=1, stride=2) + bn1 + relu.  The stride-2 input sits in the
    # even-parity rows [0, C_in) of the xeo slab; w1 carries zero columns for the
    # odd-parity rows.  The mask zeroes the per-segment padding lanes so that
    # conv2 sees genuine zero padding.
    h1 = jnp.dot(w1_ref[...], xeo_ref[...],
                 preferred_element_type=jnp.float32) + b1_ref[...]
    h1 = jnp.maximum(h1, 0.0) * mask_ref[...]                        # (R, W) f32

    # conv2 (k=15, stride=1, pad=12) + bn2 + relu as ONE im2col matmul (K = 15*R):
    # tap k reads lane offset (k - 6) relative to the output position; wrapped /
    # out-of-window reads land on masked-zero lanes, matching the zero padding.
    h1_stack = jnp.concatenate([_roll_lanes(h1, k - 6) for k in range(15)], axis=0)
    h2 = jnp.dot(w2_ref[...], h1_stack.astype(jnp.bfloat16),
                 preferred_element_type=jnp.float32) + b2_ref[...]
    h2 = jnp.maximum(h2, 0.0)                                        # (R, W) f32

    # conv3 (k=1) + bn3 fused with the shortcut conv (k=15, stride=2, pad=12) + bns:
    # ONE matmul with K = R + 16*C_in.  Lane shift m of the even/odd parity pair
    # supplies taps k = 2m and k = 2m + 1 of the stride-2 conv.
    xeo = xeo_ref[...].astype(jnp.float32)                           # (2*C_in, W)
    ep_stack = jnp.concatenate([h2] + [_roll_lanes(xeo, m) for m in range(8)],
                               axis=0)
    y = jnp.dot(wep_ref[...], ep_stack.astype(jnp.bfloat16),
                preferred_element_type=jnp.float32) + bep_ref[...]
    out_ref[...] = jnp.maximum(y, 0.0)


def projection_block_pallas(x, params):
    """x: (N, C_in, L) float32. Returns (N, E, Lo) float32."""
    N, C_in, L = x.shape
    W1, W2, W3, Ws = params["W1"], params["W2"], params["W3"], params["Ws"]
    R = W1.shape[0]
    E = W3.shape[0]

    L1 = (L - 1) // 2 + 1                    # conv1 output length
    Lo = (L + 2 * 12 - 15) // 2 + 1          # shortcut / final output length
    # Per-batch lane segment: must hold the parity slabs (L1+12 samples) and the
    # largest shifted conv2 window read (offset Lo+7); round up to a multiple of 8.
    S = max(L1 + 12, Lo + 8)
    S = -(-S // 8) * 8

    eps = 1e-5

    def fold(gamma, beta, mean, var):
        scale = gamma / jnp.sqrt(var + eps)
        return scale, beta - mean * scale

    s1, b1 = fold(*params["bn1"])
    s2, b2 = fold(*params["bn2"])
    s3, b3 = fold(*params["bn3"])
    ss, bs = fold(*params["bns"])

    # Fold BN scales into the conv weights; bf16 MXU operands, f32 accumulation.
    w1e = jnp.concatenate([s1[:, None] * W1[:, :, 0],
                           jnp.zeros((R, C_in), jnp.float32)], axis=1)        # (R, 2*C_in)
    w1e = w1e.astype(jnp.bfloat16)
    w2f = jnp.transpose(s2[:, None, None] * W2, (0, 2, 1)) \
             .reshape(R, 15 * R).astype(jnp.bfloat16)                         # (R, 15*R)
    w3k = s3[:, None] * W3[:, :, 0]                                           # (E, R)
    wsk = ss[:, None, None] * Ws                                              # (E, C_in, 15)
    wsk = jnp.concatenate([wsk, jnp.zeros((E, C_in, 1), jnp.float32)], axis=2)  # 16th tap = 0
    ws_blocks = jnp.transpose(wsk.reshape(E, C_in, 8, 2), (0, 2, 3, 1)) \
                   .reshape(E, 16 * C_in)                                     # (E, 16*C_in)
    wep = jnp.concatenate([w3k, ws_blocks], axis=1).astype(jnp.bfloat16)      # (E, R+16*C_in)

    b1k = b1[:, None].astype(jnp.float32)
    b2k = b2[:, None].astype(jnp.float32)
    bep = (b3 + bs)[:, None].astype(jnp.float32)     # conv3 + shortcut biases fused

    # Input plumbing: ONE 12-padded copy of x, split into even/odd parity slabs and
    # batch-folded into lanes.  conv1's stride-2 input is the even slab at segment
    # offset 6, so no separate strided copy of x is materialized.
    xpad = jnp.pad(x, ((0, 0), (0, 0), (12, 12)))                 # (N, C_in, L+24)
    xe = xpad[:, :, 0::2]
    xo = xpad[:, :, 1::2]

    def seg(a):
        return jnp.pad(a, ((0, 0), (0, 0), (0, S - a.shape[-1])))

    xeo = jnp.concatenate([seg(xe), seg(xo)], axis=1)             # (N, 2*C_in, S)
    xeo_slab = jnp.transpose(xeo, (1, 0, 2)).reshape(2 * C_in, N * S) \
                  .astype(jnp.bfloat16)

    pos = jnp.arange(S)
    seg_mask = ((pos >= 6) & (pos < 6 + L1)).astype(jnp.float32)
    mask = jnp.tile(seg_mask, N)[None, :]                         # (1, N*S)

    # One batch block per grid step; here NB = N (single, lane-dense step).
    # TODO(synk): for large N pick NB with NB*S a multiple of 128 and grid=(N//NB,).
    NB = N
    Wblk = NB * S
    n_blocks = N // NB

    out_slab = pl.pallas_call(
        projection_block_kernel,
        out_shape=jax.ShapeDtypeStruct((E, N * S), jnp.float32),
        grid=(n_blocks,),
        in_specs=[
            pl.BlockSpec((2 * C_in, Wblk), lambda i: (0, i)),
            pl.BlockSpec((1, Wblk), lambda i: (0, i)),
            pl.BlockSpec((R, 2 * C_in), lambda i: (0, 0)),
            pl.BlockSpec((R, 1), lambda i: (0, 0)),
            pl.BlockSpec((R, 15 * R), lambda i: (0, 0)),
            pl.BlockSpec((R, 1), lambda i: (0, 0)),
            pl.BlockSpec((E, R + 16 * C_in), lambda i: (0, 0)),
            pl.BlockSpec((E, 1), lambda i: (0, 0)),
        ],
        out_specs=pl.BlockSpec((E, Wblk), lambda i: (0, i)),
        compiler_params=pltpu.CompilerParams(dimension_semantics=("parallel",)),
    )(xeo_slab, mask, w1e, b1k, w2f, b2k, wep, bep)

    out = out_slab.reshape(E, N, S).transpose(1, 0, 2)[:, :, :Lo]
    return out


def projection_block_ref(x, params):
    """Pure-JAX reference (lax.conv), eval-mode BN; main branch cropped to shortcut length."""
    eps = 1e-5
    dn = ("NCH", "OIH", "NCH")

    def conv(h, w, stride, pad):
        return jax.lax.conv_general_dilated(h, w, (stride,), [(pad, pad)],
                                            dimension_numbers=dn)

    def bn(h, p):
        g, b, m, v = p
        return (h - m[None, :, None]) / jnp.sqrt(v[None, :, None] + eps) \
            * g[None, :, None] + b[None, :, None]

    h = jax.nn.relu(bn(conv(x, params["W1"], 2, 0), params["bn1"]))
    h = jax.nn.relu(bn(conv(h, params["W2"], 1, 12), params["bn2"]))
    h = bn(conv(h, params["W3"], 1, 0), params["bn3"])
    r = bn(conv(x, params["Ws"], 2, 12), params["bns"])
    Lo = r.shape[-1]
    return jax.nn.relu(h[:, :, :Lo] + r)


def make_params(key, in_channels, reduced_channels, expanded_channels):
    ks = jax.random.split(key, 20)

    def bn_params(k, c):
        k1, k2, k3, k4 = jax.random.split(k, 4)
        gamma = jax.random.uniform(k1, (c,), jnp.float32, 0.5, 1.5)
        beta = 0.1 * jax.random.normal(k2, (c,), jnp.float32)
        mean = 0.1 * jax.random.normal(k3, (c,), jnp.float32)
        var = jax.random.uniform(k4, (c,), jnp.float32, 0.5, 1.5)
        return (gamma, beta, mean, var)

    return {
        "W1": 0.2 * jax.random.normal(ks[0], (reduced_channels, in_channels, 1), jnp.float32),
        "W2": 0.1 * jax.random.normal(ks[1], (reduced_channels, reduced_channels, 15), jnp.float32),
        "W3": 0.2 * jax.random.normal(ks[2], (expanded_channels, reduced_channels, 1), jnp.float32),
        "Ws": 0.1 * jax.random.normal(ks[3], (expanded_channels, in_channels, 15), jnp.float32),
        "bn1": bn_params(ks[4], reduced_channels),
        "bn2": bn_params(ks[5], reduced_channels),
        "bn3": bn_params(ks[6], expanded_channels),
        "bns": bn_params(ks[7], expanded_channels),
    }


if __name__ == "__main__":
    key = jax.random.PRNGKey(0)
    kx, kp = jax.random.split(key)

    N, C_in, L = 2, 4, 16          # small shapes consistent with Conv1d NCL input
    R, E = 8, 16                   # reduced_channels, expanded_channels

    x = jax.random.normal(kx, (N, C_in, L), jnp.float32)
    params = make_params(kp, C_in, R, E)

    out = projection_block_pallas(x, params)
    out = jax.block_until_ready(out)

    ref = jax.block_until_ready(projection_block_ref(x, params))
    # bf16 MXU operands (f32 accumulation) -> slightly relaxed tolerance vs f32 ref.
    np.testing.assert_allclose(np.asarray(out), np.asarray(ref), rtol=3e-2, atol=3e-2)

    print("KERNEL_OK")
</pallas_src>

<mosaic_0001>
module attributes {stable_mosaic.version = 11 : i64} {
  func.func @projection_block_kernel(%arg0: i32, %arg1: memref<8x48xbf16, #tpu.memory_space<vmem>>, %arg2: memref<1x48xf32, #tpu.memory_space<vmem>>, %arg3: memref<8x8xbf16, #tpu.memory_space<vmem>>, %arg4: memref<8x1xf32, #tpu.memory_space<vmem>>, %arg5: memref<8x120xbf16, #tpu.memory_space<vmem>>, %arg6: memref<8x1xf32, #tpu.memory_space<vmem>>, %arg7: memref<16x72xbf16, #tpu.memory_space<vmem>>, %arg8: memref<16x1xf32, #tpu.memory_space<vmem>>, %arg9: memref<16x48xf32, #tpu.memory_space<vmem>>) attributes {dimension_semantics = [#tpu.dimension_semantics<parallel>], iteration_bounds = array<i64: 1>, scalar_prefetch = 0 : i64, scratch_operands = 0 : i64, tpu.core_type = #tpu.core_type<tc>, window_params = [{transform_indices = @transform_0, window_bounds = array<i64: 8, 48>}, {transform_indices = @transform_1, window_bounds = array<i64: 1, 48>}, {pipeline_mode = #tpu.pipeline_mode<synchronous>, transform_indices = @transform_2, window_bounds = array<i64: 8, 8>}, {pipeline_mode = #tpu.pipeline_mode<synchronous>, transform_indices = @transform_3, window_bounds = array<i64: 8, 1>}, {pipeline_mode = #tpu.pipeline_mode<synchronous>, transform_indices = @transform_4, window_bounds = array<i64: 8, 120>}, {pipeline_mode = #tpu.pipeline_mode<synchronous>, transform_indices = @transform_5, window_bounds = array<i64: 8, 1>}, {pipeline_mode = #tpu.pipeline_mode<synchronous>, transform_indices = @transform_6, window_bounds = array<i64: 16, 72>}, {pipeline_mode = #tpu.pipeline_mode<synchronous>, transform_indices = @transform_7, window_bounds = array<i64: 16, 1>}, {transform_indices = @transform_8, window_bounds = array<i64: 16, 48>}]} {
    %c0 = arith.constant 0 : index
    %c0_0 = arith.constant 0 : index
    %0 = vector.load %arg3[%c0, %c0_0] : memref<8x8xbf16, #tpu.memory_space<vmem>>, vector<8x8xbf16>
    %c0_1 = arith.constant 0 : index
    %c0_2 = arith.constant 0 : index
    %1 = vector.load %arg1[%c0_1, %c0_2] : memref<8x48xbf16, #tpu.memory_space<vmem>>, vector<8x48xbf16>
    %cst = arith.constant dense<0.000000e+00> : vector<8x48xf32>
    %2 = tpu.matmul %0, %1, %cst {dimension_numbers = #tpu.dot_dimension_numbers<[1], [0], [0], [1], [0, 0, 1, 1], [], []>} : vector<8x8xbf16>, vector<8x48xbf16>, vector<8x48xf32> -> vector<8x48xf32>
    %c0_3 = arith.constant 0 : index
    %c0_4 = arith.constant 0 : index
    %3 = vector.load %arg4[%c0_3, %c0_4] : memref<8x1xf32, #tpu.memory_space<vmem>>, vector<8x1xf32>
    %4 = vector.broadcast %3 : vector<8x1xf32> to vector<8x48xf32>
    %5 = arith.addf %2, %4 : vector<8x48xf32>
    %cst_5 = arith.constant 0.000000e+00 : f32
    %6 = vector.broadcast %cst_5 : f32 to vector<8x48xf32>
    %7 = arith.maximumf %5, %6 : vector<8x48xf32>
    %c0_6 = arith.constant 0 : index
    %c0_7 = arith.constant 0 : index
    %8 = vector.load %arg2[%c0_6, %c0_7] : memref<1x48xf32, #tpu.memory_space<vmem>>, vector<1x48xf32>
    %9 = vector.broadcast %8 : vector<1x48xf32> to vector<8x48xf32>
    %10 = arith.mulf %7, %9 : vector<8x48xf32>
    %11 = vector.extract_strided_slice %10 {offsets = [0, 42], sizes = [8, 6], strides = [1, 1]} : vector<8x48xf32> to vector<8x6xf32>
    %12 = vector.extract_strided_slice %10 {offsets = [0, 0], sizes = [8, 42], strides = [1, 1]} : vector<8x48xf32> to vector<8x42xf32>
    %13 = tpu.concatenate %11, %12 in 1 : vector<8x6xf32>, vector<8x42xf32> -> vector<8x48xf32>
    %14 = vector.extract_strided_slice %10 {offsets = [0, 43], sizes = [8, 5], strides = [1, 1]} : vector<8x48xf32> to vector<8x5xf32>
    %15 = vector.extract_strided_slice %10 {offsets = [0, 0], sizes = [8, 43], strides = [1, 1]} : vector<8x48xf32> to vector<8x43xf32>
    %16 = tpu.concatenate %14, %15 in 1 : vector<8x5xf32>, vector<8x43xf32> -> vector<8x48xf32>
    %17 = vector.extract_strided_slice %10 {offsets = [0, 44], sizes = [8, 4], strides = [1, 1]} : vector<8x48xf32> to vector<8x4xf32>
    %18 = vector.extract_strided_slice %10 {offsets = [0, 0], sizes = [8, 44], strides = [1, 1]} : vector<8x48xf32> to vector<8x44xf32>
    %19 = tpu.concatenate %17, %18 in 1 : vector<8x4xf32>, vector<8x44xf32> -> vector<8x48xf32>
    %20 = vector.extract_strided_slice %10 {offsets = [0, 45], sizes = [8, 3], strides = [1, 1]} : vector<8x48xf32> to vector<8x3xf32>
    %21 = vector.extract_strided_slice %10 {offsets = [0, 0], sizes = [8, 45], strides = [1, 1]} : vector<8x48xf32> to vector<8x45xf32>
    %22 = tpu.concatenate %20, %21 in 1 : vector<8x3xf32>, vector<8x45xf32> -> vector<8x48xf32>
    %23 = vector.extract_strided_slice %10 {offsets = [0, 46], sizes = [8, 2], strides = [1, 1]} : vector<8x48xf32> to vector<8x2xf32>
    %24 = vector.extract_strided_slice %10 {offsets = [0, 0], sizes = [8, 46], strides = [1, 1]} : vector<8x48xf32> to vector<8x46xf32>
    %25 = tpu.concatenate %23, %24 in 1 : vector<8x2xf32>, vector<8x46xf32> -> vector<8x48xf32>
    %26 = vector.extract_strided_slice %10 {offsets = [0, 47], sizes = [8, 1], strides = [1, 1]} : vector<8x48xf32> to vector<8x1xf32>
    %27 = vector.extract_strided_slice %10 {offsets = [0, 0], sizes = [8, 47], strides = [1, 1]} : vector<8x48xf32> to vector<8x47xf32>
    %28 = tpu.concatenate %26, %27 in 1 : vector<8x1xf32>, vector<8x47xf32> -> vector<8x48xf32>
    %29 = vector.extract_strided_slice %10 {offsets = [0, 1], sizes = [8, 47], strides = [1, 1]} : vector<8x48xf32> to vector<8x47xf32>
    %30 = vector.extract_strided_slice %10 {offsets = [0, 0], sizes = [8, 1], strides = [1, 1]} : vector<8x48xf32> to vector<8x1xf32>
    %31 = tpu.concatenate %29, %30 in 1 : vector<8x47xf32>, vector<8x1xf32> -> vector<8x48xf32>
    %32 = vector.extract_strided_slice %10 {offsets = [0, 2], sizes = [8, 46], strides = [1, 1]} : vector<8x48xf32> to vector<8x46xf32>
    %33 = vector.extract_strided_slice %10 {offsets = [0, 0], sizes = [8, 2], strides = [1, 1]} : vector<8x48xf32> to vector<8x2xf32>
    %34 = tpu.concatenate %32, %33 in 1 : vector<8x46xf32>, vector<8x2xf32> -> vector<8x48xf32>
    %35 = vector.extract_strided_slice %10 {offsets = [0, 3], sizes = [8, 45], strides = [1, 1]} : vector<8x48xf32> to vector<8x45xf32>
    %36 = vector.extract_strided_slice %10 {offsets = [0, 0], sizes = [8, 3], strides = [1, 1]} : vector<8x48xf32> to vector<8x3xf32>
    %37 = tpu.concatenate %35, %36 in 1 : vector<8x45xf32>, vector<8x3xf32> -> vector<8x48xf32>
    %38 = vector.extract_strided_slice %10 {offsets = [0, 4], sizes = [8, 44], strides = [1, 1]} : vector<8x48xf32> to vector<8x44xf32>
    %39 = vector.extract_strided_slice %10 {offsets = [0, 0], sizes = [8, 4], strides = [1, 1]} : vector<8x48xf32> to vector<8x4xf32>
    %40 = tpu.concatenate %38, %39 in 1 : vector<8x44xf32>, vector<8x4xf32> -> vector<8x48xf32>
    %41 = vector.extract_strided_slice %10 {offsets = [0, 5], sizes = [8, 43], strides = [1, 1]} : vector<8x48xf32> to vector<8x43xf32>
    %42 = vector.extract_strided_slice %10 {offsets = [0, 0], sizes = [8, 5], strides = [1, 1]} : vector<8x48xf32> to vector<8x5xf32>
    %43 = tpu.concatenate %41, %42 in 1 : vector<8x43xf32>, vector<8x5xf32> -> vector<8x48xf32>
    %44 = vector.extract_strided_slice %10 {offsets = [0, 6], sizes = [8, 42], strides = [1, 1]} : vector<8x48xf32> to vector<8x42xf32>
    %45 = vector.extract_strided_slice %10 {offsets = [0, 0], sizes = [8, 6], strides = [1, 1]} : vector<8x48xf32> to vector<8x6xf32>
    %46 = tpu.concatenate %44, %45 in 1 : vector<8x42xf32>, vector<8x6xf32> -> vector<8x48xf32>
    %47 = vector.extract_strided_slice %10 {offsets = [0, 7], sizes = [8, 41], strides = [1, 1]} : vector<8x48xf32> to vector<8x41xf32>
    %48 = vector.extract_strided_slice %10 {offsets = [0, 0], sizes = [8, 7], strides = [1, 1]} : vector<8x48xf32> to vector<8x7xf32>
    %49 = tpu.concatenate %47, %48 in 1 : vector<8x41xf32>, vector<8x7xf32> -> vector<8x48xf32>
    %50 = vector.extract_strided_slice %10 {offsets = [0, 8], sizes = [8, 40], strides = [1, 1]} : vector<8x48xf32> to vector<8x40xf32>
    %51 = vector.extract_strided_slice %10 {offsets = [0, 0], sizes = [8, 8], strides = [1, 1]} : vector<8x48xf32> to vector<8x8xf32>
    %52 = tpu.concatenate %50, %51 in 1 : vector<8x40xf32>, vector<8x8xf32> -> vector<8x48xf32>
    %53 = tpu.concatenate %13, %16, %19, %22, %25, %28, %10, %31, %34, %37, %40, %43, %46, %49, %52 in 0 : vector<8x48xf32>, vector<8x48xf32>, vector<8x48xf32>, vector<8x48xf32>, vector<8x48xf32>, vector<8x48xf32>, vector<8x48xf32>, vector<8x48xf32>, vector<8x48xf32>, vector<8x48xf32>, vector<8x48xf32>, vector<8x48xf32>, vector<8x48xf32>, vector<8x48xf32>, vector<8x48xf32> -> vector<120x48xf32>
    %c0_8 = arith.constant 0 : index
    %c0_9 = arith.constant 0 : index
    %54 = vector.load %arg5[%c0_8, %c0_9] : memref<8x120xbf16, #tpu.memory_space<vmem>>, vector<8x120xbf16>
    %55 = arith.truncf %53 : vector<120x48xf32> to vector<120x48xbf16>
    %cst_10 = arith.constant dense<0.000000e+00> : vector<8x48xf32>
    %56 = tpu.matmul %54, %55, %cst_10 {dimension_numbers = #tpu.dot_dimension_numbers<[1], [0], [0], [1], [0, 0, 1, 1], [], []>} : vector<8x120xbf16>, vector<120x48xbf16>, vector<8x48xf32> -> vector<8x48xf32>
    %c0_11 = arith.constant 0 : index
    %c0_12 = arith.constant 0 : index
    %57 = vector.load %arg6[%c0_11, %c0_12] : memref<8x1xf32, #tpu.memory_space<vmem>>, vector<8x1xf32>
    %58 = vector.broadcast %57 : vector<8x1xf32> to vector<8x48xf32>
    %59 = arith.addf %56, %58 : vector<8x48xf32>
    %cst_13 = arith.constant 0.000000e+00 : f32
    %60 = vector.broadcast %cst_13 : f32 to vector<8x48xf32>
    %61 = arith.maximumf %59, %60 : vector<8x48xf32>
    %c0_14 = arith.constant 0 : index
    %c0_15 = arith.constant 0 : index
    %62 = vector.load %arg1[%c0_14, %c0_15] : memref<8x48xbf16, #tpu.memory_space<vmem>>, vector<8x48xbf16>
    %63 = arith.extf %62 : vector<8x48xbf16> to vector<8x48xf32>
    %64 = vector.extract_strided_slice %63 {offsets = [0, 1], sizes = [8, 47], strides = [1, 1]} : vector<8x48xf32> to vector<8x47xf32>
    %65 = vector.extract_strided_slice %63 {offsets = [0, 0], sizes = [8, 1], strides = [1, 1]} : vector<8x48xf32> to vector<8x1xf32>
    %66 = tpu.concatenate %64, %65 in 1 : vector<8x47xf32>, vector<8x1xf32> -> vector<8x48xf32>
    %67 = vector.extract_strided_slice %63 {offsets = [0, 2], sizes = [8, 46], strides = [1, 1]} : vector<8x48xf32> to vector<8x46xf32>
    %68 = vector.extract_strided_slice %63 {offsets = [0, 0], sizes = [8, 2], strides = [1, 1]} : vector<8x48xf32> to vector<8x2xf32>
    %69 = tpu.concatenate %67, %68 in 1 : vector<8x46xf32>, vector<8x2xf32> -> vector<8x48xf32>
    %70 = vector.extract_strided_slice %63 {offsets = [0, 3], sizes = [8, 45], strides = [1, 1]} : vector<8x48xf32> to vector<8x45xf32>
    %71 = vector.extract_strided_slice %63 {offsets = [0, 0], sizes = [8, 3], strides = [1, 1]} : vector<8x48xf32> to vector<8x3xf32>
    %72 = tpu.concatenate %70, %71 in 1 : vector<8x45xf32>, vector<8x3xf32> -> vector<8x48xf32>
    %73 = vector.extract_strided_slice %63 {offsets = [0, 4], sizes = [8, 44], strides = [1, 1]} : vector<8x48xf32> to vector<8x44xf32>
    %74 = vector.extract_strided_slice %63 {offsets = [0, 0], sizes = [8, 4], strides = [1, 1]} : vector<8x48xf32> to vector<8x4xf32>
    %75 = tpu.concatenate %73, %74 in 1 : vector<8x44xf32>, vector<8x4xf32> -> vector<8x48xf32>
    %76 = vector.extract_strided_slice %63 {offsets = [0, 5], sizes = [8, 43], strides = [1, 1]} : vector<8x48xf32> to vector<8x43xf32>
    %77 = vector.extract_strided_slice %63 {offsets = [0, 0], sizes = [8, 5], strides = [1, 1]} : vector<8x48xf32> to vector<8x5xf32>
    %78 = tpu.concatenate %76, %77 in 1 : vector<8x43xf32>, vector<8x5xf32> -> vector<8x48xf32>
    %79 = vector.extract_strided_slice %63 {offsets = [0, 6], sizes = [8, 42], strides = [1, 1]} : vector<8x48xf32> to vector<8x42xf32>
    %80 = vector.extract_strided_slice %63 {offsets = [0, 0], sizes = [8, 6], strides = [1, 1]} : vector<8x48xf32> to vector<8x6xf32>
    %81 = tpu.concatenate %79, %80 in 1 : vector<8x42xf32>, vector<8x6xf32> -> vector<8x48xf32>
    %82 = vector.extract_strided_slice %63 {offsets = [0, 7], sizes = [8, 41], strides = [1, 1]} : vector<8x48xf32> to vector<8x41xf32>
    %83 = vector.extract_strided_slice %63 {offsets = [0, 0], sizes = [8, 7], strides = [1, 1]} : vector<8x48xf32> to vector<8x7xf32>
    %84 = tpu.concatenate %82, %83 in 1 : vector<8x41xf32>, vector<8x7xf32> -> vector<8x48xf32>
    %85 = tpu.concatenate %61, %63, %66, %69, %72, %75, %78, %81, %84 in 0 : vector<8x48xf32>, vector<8x48xf32>, vector<8x48xf32>, vector<8x48xf32>, vector<8x48xf32>, vector<8x48xf32>, vector<8x48xf32>, vector<8x48xf32>, vector<8x48xf32> -> vector<72x48xf32>
    %c0_16 = arith.constant 0 : index
    %c0_17 = arith.constant 0 : index
    %86 = vector.load %arg7[%c0_16, %c0_17] : memref<16x72xbf16, #tpu.memory_space<vmem>>, vector<16x72xbf16>
    %87 = arith.truncf %85 : vector<72x48xf32> to vector<72x48xbf16>
    %cst_18 = arith.constant dense<0.000000e+00> : vector<16x48xf32>
    %88 = tpu.matmul %86, %87, %cst_18 {dimension_numbers = #tpu.dot_dimension_numbers<[1], [0], [0], [1], [0, 0, 1, 1], [], []>} : vector<16x72xbf16>, vector<72x48xbf16>, vector<16x48xf32> -> vector<16x48xf32>
    %c0_19 = arith.constant 0 : index
    %c0_20 = arith.constant 0 : index
    %89 = vector.load %arg8[%c0_19, %c0_20] : memref<16x1xf32, #tpu.memory_space<vmem>>, vector<16x1xf32>
    %90 = vector.broadcast %89 : vector<16x1xf32> to vector<16x48xf32>
    %91 = arith.addf %88, %90 : vector<16x48xf32>
    %cst_21 = arith.constant 0.000000e+00 : f32
    %92 = vector.broadcast %cst_21 : f32 to vector<16x48xf32>
    %93 = arith.maximumf %91, %92 : vector<16x48xf32>
    %c0_22 = arith.constant 0 : index
    %c0_23 = arith.constant 0 : index
    %94 = vector.load %arg9[%c0_22, %c0_23] : memref<16x48xf32, #tpu.memory_space<vmem>>, vector<16x48xf32>
    tpu.vector_store %arg9[%c0_22, %c0_23], %93 {strides = array<i32>} : memref<16x48xf32, #tpu.memory_space<vmem>>, vector<16x48xf32>,
    return
  }
  func.func @transform_0(%arg0: i32) -> (i32, i32) {
    %c0_i32 = arith.constant 0 : i32
    %c0_i32_0 = arith.constant 0 : i32
    return %c0_i32, %arg0 : i32, i32
  }
  func.func @transform_1(%arg0: i32) -> (i32, i32) {
    %c0_i32 = arith.constant 0 : i32
    %c0_i32_0 = arith.constant 0 : i32
    return %c0_i32, %arg0 : i32, i32
  }
  func.func @transform_2(%arg0: i32) -> (i32, i32) {
    %c0_i32 = arith.constant 0 : i32
    %c0_i32_0 = arith.constant 0 : i32
    %c0_i32_1 = arith.constant 0 : i32
    return %c0_i32, %c0_i32_0 : i32, i32
  }
  func.func @transform_3(%arg0: i32) -> (i32, i32) {
    %c0_i32 = arith.constant 0 : i32
    %c0_i32_0 = arith.constant 0 : i32
    %c0_i32_1 = arith.constant 0 : i32
    return %c0_i32, %c0_i32_0 : i32, i32
  }
  func.func @transform_4(%arg0: i32) -> (i32, i32) {
    %c0_i32 = arith.constant 0 : i32
    %c0_i32_0 = arith.constant 0 : i32
    %c0_i32_1 = arith.constant 0 : i32
    return %c0_i32, %c0_i32_0 : i32, i32
  }
  func.func @transform_5(%arg0: i32) -> (i32, i32) {
    %c0_i32 = arith.constant 0 : i32
    %c0_i32_0 = arith.constant 0 : i32
    %c0_i32_1 = arith.constant 0 : i32
    return %c0_i32, %c0_i32_0 : i32, i32
  }
  func.func @transform_6(%arg0: i32) -> (i32, i32) {
    %c0_i32 = arith.constant 0 : i32
    %c0_i32_0 = arith.constant 0 : i32
    %c0_i32_1 = arith.constant 0 : i32
    return %c0_i32, %c0_i32_0 : i32, i32
  }
  func.func @transform_7(%arg0: i32) -> (i32, i32) {
    %c0_i32 = arith.constant 0 : i32
    %c0_i32_0 = arith.constant 0 : i32
    %c0_i32_1 = arith.constant 0 : i32
    return %c0_i32, %c0_i32_0 : i32, i32
  }
  func.func @transform_8(%arg0: i32) -> (i32, i32) {
    %c0_i32 = arith.constant 0 : i32
    %c0_i32_0 = arith.constant 0 : i32
    return %c0_i32, %arg0 : i32, i32
  }
}

</mosaic_0001>

<llo_original>
// kernel: tpu_custom_call.1
$region0: #{tpu_custom_call.1}
  #allocation0 [shape = 'u32[]', space=smem, size = 0x4, offset = 0x4, fixed_abs, tag = 'smem constant byte address 0x4 - core index']
  #allocation1 [shape = 'u32[72,128]{1,0:T(1,128)}', space=vmem, size = 0x9000, scoped, tag = 'internal scratch']
  %s0 = inlined_call_operand.vmem [shape: bf16[8,48], index: 0, kind: input, shape index: {}]
  %s1 = inlined_call_operand.vmem [shape: f32[1,48], index: 1, kind: input, shape index: {}]
  %s2 = inlined_call_operand.vmem [shape: bf16[8,8], index: 2, kind: input, shape index: {}]
  %s3 = inlined_call_operand.vmem [shape: f32[8,1], index: 3, kind: input, shape index: {}]
  %s4 = inlined_call_operand.vmem [shape: bf16[8,120], index: 4, kind: input, shape index: {}]
  %s5 = inlined_call_operand.vmem [shape: f32[8,1], index: 5, kind: input, shape index: {}]
  %s6 = inlined_call_operand.vmem [shape: bf16[16,72], index: 6, kind: input, shape index: {}]
  %s7 = inlined_call_operand.vmem [shape: f32[16,1], index: 7, kind: input, shape index: {}]
  %s8 = inlined_call_operand.hbm [shape: f32[16,48], index: 8, kind: output, shape index: {}]
  %s9 = sld [smem:[#allocation0]]
  $region42: #{tpu_custom_call.1} parent=0
    _
  %s11 = ssub.s32 1, %s9
  %s12 = scalar_select 0, %s11, %s9
  $region1: #{tpu_custom_call.1} parent=0
    #allocation2 [shape = 'u8[8192]{0}', space=vmem, size = 0x2000, scoped, tag = 'output window, operand 0, single buffered']
    #allocation3 [shape = 's32[1]{0}', space=sflag, size = 0x4, scoped, tag = 'scoped memory for tpu_custom_call.1']
    %13 = vsyncpa [#allocation3], 0
    // Predicated region
    $region2: #{tpu_custom_call.1} parent=1 // pred_check
      _
    $region3: #{tpu_custom_call.1} parent=1 // pred_check_branch
      %15 = sbr.rel (0) target = $region5
    $region4: #{tpu_custom_call.1} parent=1 // pred_region
      _
    $region5: #{tpu_custom_call.1} parent=1 // pred_fallthru
      _
    // Predicated region
    $region6: #{tpu_custom_call.1} parent=1 // pred_check
      _
    $region7: #{tpu_custom_call.1} parent=1 // pred_check_branch
      %17 = sbr.rel (0) target = $region9
    $region8: #{tpu_custom_call.1} parent=1 // pred_region
      _
    $region9: #{tpu_custom_call.1} parent=1 // pred_fallthru
      _
    // Predicated region
    $region10: #{tpu_custom_call.1} parent=1 // pred_check
      _
    $region11: #{tpu_custom_call.1} parent=1 // pred_check_branch
      %19 = sbr.rel (0) target = $region13
    $region12: #{tpu_custom_call.1} parent=1 // pred_region
      _
    $region13: #{tpu_custom_call.1} parent=1 // pred_fallthru
      _
    // Predicated region
    $region14: #{tpu_custom_call.1} parent=1 // pred_check
      _
    $region15: #{tpu_custom_call.1} parent=1 // pred_check_branch
      %21 = sbr.rel (0) target = $region17
    $region16: #{tpu_custom_call.1} parent=1 // pred_region
      _
    $region17: #{tpu_custom_call.1} parent=1 // pred_fallthru
      _
    // Predicated region
    $region18: #{tpu_custom_call.1} parent=1 // pred_check
      _
    $region19: #{tpu_custom_call.1} parent=1 // pred_check_branch
      %23 = sbr.rel (0) target = $region21
    $region20: #{tpu_custom_call.1} parent=1 // pred_region
      _
    $region21: #{tpu_custom_call.1} parent=1 // pred_fallthru
      _
    // Predicated region
    $region22: #{tpu_custom_call.1} parent=1 // pred_check
      _
    $region23: #{tpu_custom_call.1} parent=1 // pred_check_branch
      %25 = sbr.rel (0) target = $region25
    $region24: #{tpu_custom_call.1} parent=1 // pred_region
      _
    $region25: #{tpu_custom_call.1} parent=1 // pred_fallthru
      _
    // Predicated region
    $region26: #{tpu_custom_call.1} parent=1 // pred_check
      _
    $region27: #{tpu_custom_call.1} parent=1 // pred_check_branch
      %27 = sbr.rel (0) target = $region29
    $region28: #{tpu_custom_call.1} parent=1 // pred_region
      _
    $region29: #{tpu_custom_call.1} parent=1 // pred_fallthru
      _
    // Predicated region
    $region30: #{tpu_custom_call.1} parent=1 // pred_check
      _
    $region31: #{tpu_custom_call.1} parent=1 // pred_check_branch
      %29 = sbr.rel (0) target = $region33
    $region32: #{tpu_custom_call.1} parent=1 // pred_region
      _
    $region33: #{tpu_custom_call.1} parent=1 // pred_fallthru
      _
    %v31 = vld [vmem:[%s2] sm:$0xf]
    %v32 = vld [vmem:[%s0] sm:$0xf]
    %v33 = vld [vmem:[%s3] sm:$0xff]
    %35 = vset.pattern.permute.xlu0 0
    %36 = vperm.xlu0 %35, %v33
    %v37 = vpop.permute.xlu0 %36
    %vm39 = vcmask 64512
    %v41 = vsel %vm39, %v31, 0
    %vm43 = vcmask 1043456
    %v45 = vsel %vm43, %v32, 0
    %47 = vmatpush.bf16.msra.mxu0 0
    %48 = vmatpush.bf16.msra.mxu0 0
    %49 = vmatpush.bf16.msra.mxu0 0
    %50 = vmatpush.bf16.msra.mxu0 0
    %51 = vmatpush.bf16.msra.mxu0 0
    %52 = vmatpush.bf16.msra.mxu0 0
    %53 = vmatpush.bf16.msra.mxu0 0
    %54 = vmatpush.bf16.msra.mxu0 %v45
    %55 = vmatmul.bf16.gmra.mxu0 %v41
    %v56 = vpop.f32.mrf.mxu0
    %v57 = vadd.f32 %v37, %v56
    %v58 = vpop.f32.mrf.mxu0
    %59 = vdwg.mxu0
    %v60 = vmax.f32 %v57, 0.0
    %v61 = vld [vmem:[%s1] sm:$0x1]
    %v63 = vperm.slane %v61, 0
    %v65 = vmul.f32 %v60, %v63
    %67 = vrot.lane.b32.xlu0 %v65, 86
    %v68 = vpop.permute.xlu0 %67
    %70 = vrot.lane.b32.xlu0 %v65, 6
    %v71 = vpop.permute.xlu0 %70
    %vm73 = vcmask 48128
    %v74 = vsel %vm73, %v68, %v71
    %75 = vrot.lane.b32.xlu0 %v65, 85
    %v76 = vpop.permute.xlu0 %75
    %78 = vrot.lane.b32.xlu0 %v65, 5
    %v79 = vpop.permute.xlu0 %78
    %vm81 = vcmask 39936
    %v82 = vsel %vm81, %v76, %v79
    %83 = vrot.lane.b32.xlu0 %v65, 84
    %v84 = vpop.permute.xlu0 %83
    %86 = vrot.lane.b32.xlu0 %v65, 4
    %v87 = vpop.permute.xlu0 %86
    %vm89 = vcmask 31744
    %v90 = vsel %vm89, %v84, %v87
    %91 = vrot.lane.b32.xlu0 %v65, 83
    %v92 = vpop.permute.xlu0 %91
    %94 = vrot.lane.b32.xlu0 %v65, 3
    %v95 = vpop.permute.xlu0 %94
    %vm97 = vcmask 23552
    %v98 = vsel %vm97, %v92, %v95
    %99 = vrot.lane.b32.xlu0 %v65, 82
    %v100 = vpop.permute.xlu0 %99
    %102 = vrot.lane.b32.xlu0 %v65, 2
    %v103 = vpop.permute.xlu0 %102
    %vm105 = vcmask 15360
    %v106 = vsel %vm105, %v100, %v103
    %107 = vrot.lane.b32.xlu0 %v65, 81
    %v108 = vpop.permute.xlu0 %107
    %110 = vrot.lane.b32.xlu0 %v65, 1
    %v111 = vpop.permute.xlu0 %110
    %vm113 = vcmask 7168
    %v114 = vsel %vm113, %v108, %v111
    %115 = vrot.lane.b32.xlu0 %v65, 127
    %v116 = vpop.permute.xlu0 %115
    %118 = vrot.lane.b32.xlu0 %v65, 47
    %v119 = vpop.permute.xlu0 %118
    %vm121 = vcmask 384000
    %v122 = vsel %vm121, %v116, %v119
    %123 = vrot.lane.b32.xlu0 %v65, 126
    %v124 = vpop.permute.xlu0 %123
    %126 = vrot.lane.b32.xlu0 %v65, 46
    %v127 = vpop.permute.xlu0 %126
    %vm129 = vcmask 375808
    %v130 = vsel %vm129, %v124, %v127
    %131 = vrot.lane.b32.xlu0 %v65, 125
    %v132 = vpop.permute.xlu0 %131
    %134 = vrot.lane.b32.xlu0 %v65, 45
    %v135 = vpop.permute.xlu0 %134
    %vm137 = vcmask 367616
    %v138 = vsel %vm137, %v132, %v135
    %139 = vrot.lane.b32.xlu0 %v65, 124
    %v140 = vpop.permute.xlu0 %139
    %142 = vrot.lane.b32.xlu0 %v65, 44
    %v143 = vpop.permute.xlu0 %142
    %vm145 = vcmask 359424
    %v146 = vsel %vm145, %v140, %v143
    %147 = vrot.lane.b32.xlu0 %v65, 123
    %v148 = vpop.permute.xlu0 %147
    %150 = vrot.lane.b32.xlu0 %v65, 43
    %v151 = vpop.permute.xlu0 %150
    %vm153 = vcmask 351232
    %v154 = vsel %vm153, %v148, %v151
    %155 = vrot.lane.b32.xlu0 %v65, 122
    %v156 = vpop.permute.xlu0 %155
    %158 = vrot.lane.b32.xlu0 %v65, 42
    %v159 = vpop.permute.xlu0 %158
    %vm161 = vcmask 343040
    %v162 = vsel %vm161, %v156, %v159
    %163 = vrot.lane.b32.xlu0 %v65, 121
    %v164 = vpop.permute.xlu0 %163
    %166 = vrot.lane.b32.xlu0 %v65, 41
    %v167 = vpop.permute.xlu0 %166
    %vm169 = vcmask 334848
    %v170 = vsel %vm169, %v164, %v167
    %171 = vrot.lane.b32.xlu0 %v65, 120
    %v172 = vpop.permute.xlu0 %171
    %174 = vrot.lane.b32.xlu0 %v65, 40
    %v175 = vpop.permute.xlu0 %174
    %vm177 = vcmask 326656
    %v178 = vsel %vm177, %v172, %v175
    %v179 = vld [vmem:[%s4] sm:$0xf]
    %v180 = vpack.c.bf16 %v82, %v74
    %v181 = vpack.c.bf16 %v98, %v90
    %v182 = vpack.c.bf16 %v114, %v106
    %v183 = vpack.c.bf16 %v122, %v65
    %v184 = vpack.c.bf16 %v138, %v130
    %v185 = vpack.c.bf16 %v154, %v146
    %v186 = vpack.c.bf16 %v170, %v162
    %v187 = vpack.c.bf16 %v178, %v178
    %v188 = vld [vmem:[%s5] sm:$0xff]
    %190 = vset.pattern.permute.xlu0 0
    %191 = vperm.xlu0 %190, %v188
    %v192 = vpop.permute.xlu0 %191
    %vm194 = vcmask 982016
    %v196 = vsel %vm194, %v179, 0
    %v199 = vsel %vm43, %v187, 0
    %201 = vmatpush.bf16.msra.mxu0 %v199
    %202 = vmatpush.bf16.msra.mxu0 %v186
    %203 = vmatpush.bf16.msra.mxu0 %v185
    %204 = vmatpush.bf16.msra.mxu0 %v184
    %205 = vmatpush.bf16.msra.mxu0 %v183
    %206 = vmatpush.bf16.msra.mxu0 %v182
    %207 = vmatpush.bf16.msra.mxu0 %v181
    %208 = vmatpush.bf16.msra.mxu0 %v180
    %209 = vmatmul.bf16.gmra.mxu0 %v196
    %v210 = vpop.f32.mrf.mxu0
    %v211 = vadd.f32 %v192, %v210
    %v212 = vpop.f32.mrf.mxu0
    %213 = vdwg.mxu0
    %v214 = vmax.f32 %v211, 0.0
    %v215 = vunpack.c.l.bf16 %v32
    %217 = vrot.lane.b32.xlu0 %v215, 127
    %v218 = vpop.permute.xlu0 %217
    %220 = vrot.lane.b32.xlu0 %v215, 47
    %v221 = vpop.permute.xlu0 %220
    %v223 = vsel %vm121, %v218, %v221
    %224 = vrot.lane.b32.xlu0 %v215, 126
    %v225 = vpop.permute.xlu0 %224
    %227 = vrot.lane.b32.xlu0 %v215, 46
    %v228 = vpop.permute.xlu0 %227
    %v230 = vsel %vm129, %v225, %v228
    %231 = vrot.lane.b32.xlu0 %v215, 125
    %v232 = vpop.permute.xlu0 %231
    %234 = vrot.lane.b32.xlu0 %v215, 45
    %v235 = vpop.permute.xlu0 %234
    %v237 = vsel %vm137, %v232, %v235
    %238 = vrot.lane.b32.xlu0 %v215, 124
    %v239 = vpop.permute.xlu0 %238
    %241 = vrot.lane.b32.xlu0 %v215, 44
    %v242 = vpop.permute.xlu0 %241
    %v244 = vsel %vm145, %v239, %v242
    %245 = vrot.lane.b32.xlu0 %v215, 123
    %v246 = vpop.permute.xlu0 %245
    %248 = vrot.lane.b32.xlu0 %v215, 43
    %v249 = vpop.permute.xlu0 %248
    %v251 = vsel %vm153, %v246, %v249
    %252 = vrot.lane.b32.xlu0 %v215, 122
    %v253 = vpop.permute.xlu0 %252
    %255 = vrot.lane.b32.xlu0 %v215, 42
    %v256 = vpop.permute.xlu0 %255
    %v258 = vsel %vm161, %v253, %v256
    %259 = vrot.lane.b32.xlu0 %v215, 121
    %v260 = vpop.permute.xlu0 %259
    %262 = vrot.lane.b32.xlu0 %v215, 41
    %v263 = vpop.permute.xlu0 %262
    %v265 = vsel %vm169, %v260, %v263
    %v266 = vld [vmem:[%s6] sm:$0xf]
    %v267 = vld [vmem:[%s6 + $0x4] sm:$0xf]
    %v268 = vpack.c.bf16 %v215, %v214
    %v269 = vpack.c.bf16 %v230, %v223
    %v270 = vpack.c.bf16 %v244, %v237
    %v271 = vpack.c.bf16 %v258, %v251
    %v272 = vpack.c.bf16 %v265, %v265
    %v273 = vld [vmem:[%s7] sm:$0xff]
    %v274 = vld [vmem:[%s7 + $0x8] sm:$0xff]
    %276 = vset.pattern.permute.xlu0 0
    %277 = vperm.xlu0 %276, %v273
    %v278 = vpop.permute.xlu0 %277
    %281 = vset.pattern.permute.xlu0 0
    %282 = vperm.xlu0 %281, %v274
    %v283 = vpop.permute.xlu0 %282
    %v287 = vunpack.c.l.b16 %v266
    %v288 = vunpack.c.l.b16 %v267
    %v289 = vpack.c.b16 %v288, %v287
    %vm290 = vcmask 588800
    %v292 = vsel %vm290, %v289, 0
    %v295 = vsel %vm43, %v272, 0
    %297 = vmatpush.bf16.msra.mxu0 0
    %298 = vmatpush.bf16.msra.mxu0 0
    %299 = vmatpush.bf16.msra.mxu0 0
    %300 = vmatpush.bf16.msra.mxu0 %v295
    %301 = vmatpush.bf16.msra.mxu0 %v271
    %302 = vmatpush.bf16.msra.mxu0 %v270
    %303 = vmatpush.bf16.msra.mxu0 %v269
    %304 = vmatpush.bf16.msra.mxu0 %v268
    %305 = vmatmul.bf16.gmra.mxu0 %v292
    %v306 = vpop.f32.mrf.mxu0
    %v307 = vadd.f32 %v278, %v306
    %v308 = vpop.f32.mrf.mxu0
    %v309 = vadd.f32 %v283, %v308
    %310 = vdwg.mxu0
    %v311 = vmax.f32 %v307, 0.0
    %v312 = vmax.f32 %v309, 0.0
    %vm313 = vcmask 392192
    %314 = vst.msk [vmem:[#allocation2] sm:$0xff] %vm313, %v311
    %315 = vst.msk [vmem:[#allocation2 + $0x8] sm:$0xff] %vm313, %v312
    // Predicated region
    $region34: #{tpu_custom_call.1} parent=1 // pred_check
      _
    $region35: #{tpu_custom_call.1} parent=1 // pred_check_branch
      %317 = sbr.rel (0) target = $region37
    $region36: #{tpu_custom_call.1} parent=1 // pred_region
      %319 = vsyncadd [#allocation3], 0
      %s320 = sshll.u32 [#allocation2], 4
      %s321 = int_to_ptr.vmem [resolvable:$true] %s320
      %s322 = sshll.u32 %s8, 4
      %s323 = int_to_ptr.hbm [resolvable:$true] %s322
      %328 = dma.vmem_to_hbm [thread:$0]  %s321, 256, %s323, [#allocation3], 128, 128, 8
    $region37: #{tpu_custom_call.1} parent=1 // pred_fallthru
      _
    // Predicated region
    $region38: #{tpu_custom_call.1} parent=1 // pred_check
      _
    $region39: #{tpu_custom_call.1} parent=1 // pred_check_branch
      %330 = sbr.rel (0) target = $region41
    $region40: #{tpu_custom_call.1} parent=1 // pred_region
      %332 = dma.done [#allocation3], 256
    $region41: #{tpu_custom_call.1} parent=1 // pred_fallthru
      _
    %333 = vsyncpa [#allocation3], 1

</llo_original>
